<compile_context>
chip_gen: v6e
topology: v6e:2x2x1
jax: 0.10.0
libtpu: 0.0.40
codegen_flags: <defaults>
</compile_context>

<pallas_src>
import numpy as np
import jax
import jax.numpy as jnp
from jax import lax
from jax.experimental import pallas as pl
from jax.experimental.pallas import tpu as pltpu


def _round_up(x, m):
    return (x + m - 1) // m * m


# tap index = (dy + 1) * 3 + (dx + 1) = ky * 3 + kx  (matches weight packing below)
_TAPS = tuple((dy, dx) for dy in (-1, 0, 1) for dx in (-1, 0, 1))


# --------------------------------------------------------------------------- kernel
def _make_block_kernel(H, W):
    """Kernel closure over the static spatial size."""
    HW = H * W

    def kernel(coef_ref,           # SMEM (2,)  [c1, c2] precomputed scalar coefficients
               x_ref,              # VMEM (Cp, L)   L = images_per_block * H * W
               rxn_ref,            # VMEM (Cp, L)
               w1_ref, b1_ref,     # VMEM (Cp, 9*Cp), (Cp, 1)
               w2_ref, b2_ref,     # VMEM (Cp, 9*Cp), (Cp, 1)
               out_ref,            # VMEM (Cp, L)
               col_ref):           # VMEM scratch (9*Cp, L) -- im2col operand, reused by both convs
        f32 = jnp.float32
        Cp, L = x_ref.shape
        xv = x_ref[...]                                        # (Cp, L)

        # Border masks over the flattened (image, y, x) lane axis. Built ONCE per grid
        # step (corner products hoisted) and shared by both im2col passes. They also
        # zero every position where a cyclic roll would wrap data around the slab or
        # across an image boundary, which is what makes the roll-based gather exact.
        lane = lax.broadcasted_iota(jnp.int32, (1, L), 1)
        q = lane % HW                                          # index within one image
        xx = lane % W                                          # column index
        ok_top = (q >= W).astype(f32)                          # y > 0     (valid for dy = -1)
        ok_bot = (q < HW - W).astype(f32)                      # y < H-1   (valid for dy = +1)
        ok_left = (xx > 0).astype(f32)                         # x > 0     (valid for dx = -1)
        ok_right = (xx < W - 1).astype(f32)                    # x < W-1   (valid for dx = +1)
        tl = ok_top * ok_left
        tr = ok_top * ok_right
        bl = ok_bot * ok_left
        br = ok_bot * ok_right
        tap_masks = {
            (-1, -1): tl, (-1, 0): ok_top, (-1, 1): tr,
            (0, -1): ok_left, (0, 0): None, (0, 1): ok_right,
            (1, -1): bl, (1, 0): ok_bot, (1, 1): br,
        }

        def im2col_into_scratch(a):
            # Zero-padded 3x3 neighbourhood gather: each tap is a static cyclic lane
            # roll (XLU slot, idle here) of the flattened slab; masks ride the VPU.
            # Each masked tap is stored straight into the VMEM scratch (aligned
            # 8-sublane groups), so no big register concat / spills.
            for t, (dy, dx) in enumerate(_TAPS):
                s = dy * W + dx                               # value at p = a[:, p + s]
                shifted = a if s == 0 else pltpu.roll(a, shift=(-s) % L, axis=1)
                m = tap_masks[(dy, dx)]
                val = shifted if m is None else shifted * m
                col_ref[t * Cp:(t + 1) * Cp, :] = val.astype(col_ref.dtype)

        # conv1: single (Cp, 9*Cp) @ (9*Cp, L) matmul + bias + ReLU
        im2col_into_scratch(xv)
        mid = jnp.dot(w1_ref[...].astype(col_ref.dtype), col_ref[...],
                      preferred_element_type=jnp.float32) + b1_ref[...]
        mid = jnp.maximum(mid, 0.0)

        # conv2: same scratch, refilled (dependence through col_ref orders it after dot #1)
        im2col_into_scratch(mid)
        conv2 = jnp.dot(w2_ref[...].astype(col_ref.dtype), col_ref[...],
                        preferred_element_type=jnp.float32) + b2_ref[...]

        # reaction / residual elementwise combine (f32 on the VPU)
        c1 = coef_ref[0]    # self.alpha * tanh(-alpha)
        c2 = coef_ref[1]    # self.beta  * beta * tanh(beta)
        out_ref[...] = c1 * conv2 + c2 * (rxn_ref[...] - xv) + xv

    return kernel


# ----------------------------------------------------------------- layout converters
def pack_activations_nchw(a_nchw, Cp):
    """NCHW -> kernel-native (Cp, N*H*W): channels on sublanes, flat (n,y,x) on lanes.
    Do this ONCE per network input; chain Blocks in the packed layout."""
    N, C, H, W = a_nchw.shape
    a = jnp.transpose(a_nchw, (1, 0, 2, 3)).reshape(C, N * H * W).astype(jnp.float32)
    return jnp.pad(a, ((0, Cp - C), (0, 0)))


def unpack_activations_nchw(a2d, N, C, H, W):
    """Inverse of pack_activations_nchw (do this once at the end of the network)."""
    out = a2d[:C].reshape(C, N, H, W)
    return jnp.transpose(out, (1, 0, 2, 3))


def pack_block_params(params, Cp):
    """One-time conversion of the module parameters into the kernel layout."""
    C = params["w1"].shape[1]

    def conv_w(w):
        # torch (Cout, Cin, 3, 3) -> (Cp, 9*Cp); column index = (ky*3 + kx)*Cp + ci
        wt = jnp.transpose(w, (0, 2, 3, 1)).astype(jnp.float32)   # (Cout, 3, 3, Cin)
        wt = jnp.pad(wt, ((0, Cp - C), (0, 0), (0, 0), (0, Cp - C)))
        return wt.reshape(Cp, 9 * Cp)

    def bias(b):
        return jnp.pad(b.astype(jnp.float32), (0, Cp - C)).reshape(Cp, 1)

    return dict(w1=conv_w(params["w1"]), b1=bias(params["b1"]),
                w2=conv_w(params["w2"]), b2=bias(params["b2"]),
                self_alpha=params["self_alpha"].astype(jnp.float32),
                self_beta=params["self_beta"].astype(jnp.float32))


# ----------------------------------------------------------------------- VMEM model
def _vmem_capacity_bytes():
    try:
        info = pltpu.get_tpu_info()
        cap = getattr(info, "vmem_capacity_bytes", None)
        if cap:
            return int(cap)
    except Exception:
        pass
    return 64 * 1024 * 1024   # conservative floor (v7x per-TC VMEM)


def _pick_images_per_block(N, HW, Cp, budget_bytes, fixed_bytes):
    """Largest images-per-step that fits the VMEM budget, preferring >= 2 grid steps
    (so both TensorCores get work on v7x). Fails loudly if nothing fits."""
    itemsize = 4
    # x / reaction / out blocks are double-buffered (2*3), the (9*Cp, L) im2col
    # scratch (9), plus slack for conv temporaries (~4 tiles of (Cp, L)).
    per_img = (2 * 3 + 9 + 4) * Cp * HW * itemsize

    def lane_ok(cand):
        # last dim of the block must be a multiple of 128, or the full array extent
        return (cand * HW) % 128 == 0 or cand == N

    def fits(cand):
        return fixed_bytes + cand * per_img <= budget_bytes

    divisors = [d for d in range(1, N + 1) if N % d == 0]
    for cand in sorted((d for d in divisors if d < N), reverse=True):
        if lane_ok(cand) and fits(cand):
            return cand                       # >= 2 grid steps
    if lane_ok(N) and fits(N):
        return N                              # e.g. N == 1, or HW not a multiple of 128
    raise ValueError(
        f"Block: no per-step image count fits the VMEM budget "
        f"(N={N}, HW={HW}, Cp={Cp}, budget={budget_bytes} bytes, fixed={fixed_bytes}).")


# -------------------------------------------------------------------------- forward
def block_forward_packed(packed, x2d, r2d, alpha, beta, *, N, H, W):
    """Block forward in the kernel-native (Cp, N*H*W) layout.
    Chain multiple Blocks by feeding the returned array straight back in
    (padded channel rows remain exactly zero)."""
    f32 = jnp.float32
    Cp, tot = x2d.shape
    HW = H * W
    assert tot == N * HW and Cp % 8 == 0

    # Scalar glue: coefficient math for the elementwise combine (scalar tanh).
    a = jnp.asarray(alpha, f32)
    b = jnp.asarray(beta, f32)
    c1 = packed["self_alpha"][0] * jnp.tanh(-a)
    c2 = packed["self_beta"][0] * b * jnp.tanh(b)
    coef = jnp.stack([c1, c2]).astype(f32)      # (2,) -> SMEM

    # VMEM budget from the actual part (64 MiB on v7x, 128 MiB on v5e/v6e).
    cap = _vmem_capacity_bytes()
    vmem_limit = int(min(cap * 3 // 4, 96 * 1024 * 1024))
    fixed = 2 * 2 * (Cp * 9 * Cp + Cp) * 4      # w1,b1,w2,b2 (double-buffered)
    nb = _pick_images_per_block(N, HW, Cp, int(vmem_limit * 0.9), fixed)
    L = nb * HW

    # bf16 MXU operands only once the convs are MXU-bound (production C); all
    # elementwise math stays f32 (v5e has no bf16 VPU/EUP).
    compute_dtype = jnp.bfloat16 if Cp >= 128 else jnp.float32

    kernel = _make_block_kernel(H, W)
    out2d = pl.pallas_call(
        kernel,
        out_shape=jax.ShapeDtypeStruct((Cp, N * HW), f32),
        grid=(N // nb,),
        in_specs=[
            pl.BlockSpec(memory_space=pltpu.MemorySpace.SMEM),   # coef scalars
            pl.BlockSpec((Cp, L), lambda i: (0, i)),             # x
            pl.BlockSpec((Cp, L), lambda i: (0, i)),             # reaction
            # Grid-constant weights/biases (index pinned to (0,0) -> fetched once).
            # On v7x at production Cp, single-buffer these (pipeline_mode=pl.Buffered(1))
            # to reclaim VMEM; left default here since it is free at this scale.
            pl.BlockSpec((Cp, 9 * Cp), lambda i: (0, 0)),        # w1
            pl.BlockSpec((Cp, 1), lambda i: (0, 0)),             # b1
            pl.BlockSpec((Cp, 9 * Cp), lambda i: (0, 0)),        # w2
            pl.BlockSpec((Cp, 1), lambda i: (0, 0)),             # b2
        ],
        out_specs=pl.BlockSpec((Cp, L), lambda i: (0, i)),
        scratch_shapes=[pltpu.VMEM((9 * Cp, L), compute_dtype)], # shared im2col operand
        compiler_params=pltpu.CompilerParams(
            dimension_semantics=("parallel",),                   # independent images
            vmem_limit_bytes=vmem_limit),
    )(coef, x2d, r2d, packed["w1"], packed["b1"], packed["w2"], packed["b2"])
    return out2d


def block_forward(params, x_nchw, reaction_nchw, alpha, beta):
    """NCHW convenience wrapper (packs/unpacks once). For a full ReactionNet, pack
    once, call block_forward_packed per Block, unpack once at the very end."""
    N, C, H, W = x_nchw.shape
    Cout, Cin = params["w1"].shape[:2]
    assert Cin == C and Cout == C, "Block requires in_channels == out_channels"
    Cp = _round_up(C, 8)
    packed = pack_block_params(params, Cp)
    x2d = pack_activations_nchw(x_nchw, Cp)
    r2d = pack_activations_nchw(reaction_nchw, Cp)
    out2d = block_forward_packed(packed, x2d, r2d, alpha, beta, N=N, H=H, W=W)
    return unpack_activations_nchw(out2d, N, C, H, W)


# ----------------------------------------------------------------- params / reference
def init_block_params(key, in_channels, out_channels):
    """Deterministic synthetic parameters matching the PyTorch module's shapes."""
    k1, k2, k3, k4 = jax.random.split(key, 4)
    fan_in = in_channels * 9
    bound = 1.0 / np.sqrt(fan_in)
    w1 = jax.random.uniform(k1, (out_channels, in_channels, 3, 3), jnp.float32, -bound, bound)
    b1 = jax.random.uniform(k2, (out_channels,), jnp.float32, -bound, bound)
    w2 = jax.random.uniform(k3, (out_channels, in_channels, 3, 3), jnp.float32, -bound, bound)
    b2 = jax.random.uniform(k4, (out_channels,), jnp.float32, -bound, bound)
    return dict(
        w1=w1, b1=b1, w2=w2, b2=b2,
        self_alpha=jnp.ones((1,), jnp.float32),   # nn.Parameter filled with 1
        self_beta=jnp.ones((1,), jnp.float32),    # nn.Parameter filled with 1
    )


def _ref_forward(params, x, reaction, alpha, beta):
    """Pure-JAX reference of the PyTorch forward (NCHW in/out)."""
    w1 = jnp.transpose(params["w1"], (2, 3, 1, 0))   # HWIO
    w2 = jnp.transpose(params["w2"], (2, 3, 1, 0))
    xn = jnp.transpose(x, (0, 2, 3, 1)).astype(jnp.float32)
    rn = jnp.transpose(reaction, (0, 2, 3, 1)).astype(jnp.float32)
    dn = lax.conv_dimension_numbers(xn.shape, w1.shape, ("NHWC", "HWIO", "NHWC"))
    o = lax.conv_general_dilated(xn, w1, (1, 1), ((1, 1), (1, 1)), dimension_numbers=dn)
    o = o + params["b1"]
    o = jnp.maximum(o, 0.0)
    o = lax.conv_general_dilated(o, w2, (1, 1), ((1, 1), (1, 1)), dimension_numbers=dn)
    o = o + params["b2"]
    c1 = params["self_alpha"][0] * jnp.tanh(-jnp.float32(alpha))
    c2 = params["self_beta"][0] * jnp.float32(beta) * jnp.tanh(jnp.float32(beta))
    o = c1 * o + c2 * (rn - xn) + xn
    return jnp.transpose(o, (0, 3, 1, 2))


if __name__ == "__main__":
    key = jax.random.PRNGKey(0)
    kx, kr, kp = jax.random.split(key, 3)

    # small shapes: batch=2, channels=4 (in == out, as the module requires), spatial=16
    N, C, H, W = 2, 4, 16, 16
    x = jax.random.normal(kx, (N, C, H, W), jnp.float32)
    reaction = jax.random.normal(kr, (N, C, H, W), jnp.float32)
    alpha = 0.5
    beta = 0.25
    params = init_block_params(kp, C, C)

    out = block_forward(params, x, reaction, alpha, beta)
    out = jax.block_until_ready(out)

    ref = _ref_forward(params, x, reaction, alpha, beta)
    assert out.shape == (N, C, H, W)
    err = float(jnp.max(jnp.abs(out - ref)))
    assert jnp.allclose(out, ref, atol=1e-4, rtol=1e-4), err

    print("KERNEL_OK")
</pallas_src>

<mosaic_0001>
module attributes {stable_mosaic.version = 11 : i64} {
  func.func @kernel(%arg0: i32, %arg1: memref<2xf32, #tpu.memory_space<smem>>, %arg2: memref<8x256xf32, #tpu.memory_space<vmem>>, %arg3: memref<8x256xf32, #tpu.memory_space<vmem>>, %arg4: memref<8x72xf32, #tpu.memory_space<vmem>>, %arg5: memref<8x1xf32, #tpu.memory_space<vmem>>, %arg6: memref<8x72xf32, #tpu.memory_space<vmem>>, %arg7: memref<8x1xf32, #tpu.memory_space<vmem>>, %arg8: memref<8x256xf32, #tpu.memory_space<vmem>>, %arg9: memref<72x256xf32, #tpu.memory_space<vmem>>) attributes {dimension_semantics = [#tpu.dimension_semantics<parallel>], iteration_bounds = array<i64: 2>, scalar_prefetch = 0 : i64, scratch_operands = 1 : i64, tpu.core_type = #tpu.core_type<tc>, window_params = [{transform_indices = @transform_0, window_bounds = array<i64: 2>}, {transform_indices = @transform_1, window_bounds = array<i64: 8, 256>}, {transform_indices = @transform_2, window_bounds = array<i64: 8, 256>}, {pipeline_mode = #tpu.pipeline_mode<synchronous>, transform_indices = @transform_3, window_bounds = array<i64: 8, 72>}, {pipeline_mode = #tpu.pipeline_mode<synchronous>, transform_indices = @transform_4, window_bounds = array<i64: 8, 1>}, {pipeline_mode = #tpu.pipeline_mode<synchronous>, transform_indices = @transform_5, window_bounds = array<i64: 8, 72>}, {pipeline_mode = #tpu.pipeline_mode<synchronous>, transform_indices = @transform_6, window_bounds = array<i64: 8, 1>}, {transform_indices = @transform_7, window_bounds = array<i64: 8, 256>}]} {
    %c0 = arith.constant 0 : index
    %c0_0 = arith.constant 0 : index
    %0 = vector.load %arg2[%c0, %c0_0] : memref<8x256xf32, #tpu.memory_space<vmem>>, vector<8x256xf32>
    %1 = tpu.iota {dimensions = array<i32: 1>} : vector<1x256xi32>
    %c256_i32 = arith.constant 256 : i32
    %c0_i32 = arith.constant 0 : i32
    %2 = arith.cmpi eq, %c256_i32, %c0_i32 : i32
    %c1_i32 = arith.constant 1 : i32
    %3 = arith.select %2, %c1_i32, %c256_i32 : i32
    %4 = vector.broadcast %3 : i32 to vector<1x256xi32>
    %5 = arith.remsi %1, %4 : vector<1x256xi32>
    %c0_i32_1 = arith.constant 0 : i32
    %6 = vector.broadcast %c0_i32_1 : i32 to vector<1x256xi32>
    %7 = arith.cmpi ne, %5, %6 : vector<1x256xi32>
    %c0_i32_2 = arith.constant 0 : i32
    %8 = vector.broadcast %c0_i32_2 : i32 to vector<1x256xi32>
    %9 = arith.cmpi slt, %5, %8 : vector<1x256xi32>
    %c0_i32_3 = arith.constant 0 : i32
    %10 = arith.cmpi slt, %3, %c0_i32_3 : i32
    %11 = vector.broadcast %10 : i1 to vector<1x256xi1>
    %12 = vector.broadcast %11 : vector<1x256xi1> to vector<1x256xi1>
    %13 = arith.xori %9, %12 : vector<1x256xi1>
    %14 = arith.andi %13, %7 : vector<1x256xi1>
    %15 = vector.broadcast %3 : i32 to vector<1x256xi32>
    %16 = arith.addi %5, %15 : vector<1x256xi32>
    %17 = arith.select %14, %16, %5 : vector<1x256xi1>, vector<1x256xi32>
    %c16_i32 = arith.constant 16 : i32
    %c0_i32_4 = arith.constant 0 : i32
    %18 = arith.cmpi eq, %c16_i32, %c0_i32_4 : i32
    %c1_i32_5 = arith.constant 1 : i32
    %19 = arith.select %18, %c1_i32_5, %c16_i32 : i32
    %20 = vector.broadcast %19 : i32 to vector<1x256xi32>
    %21 = arith.remsi %1, %20 : vector<1x256xi32>
    %c0_i32_6 = arith.constant 0 : i32
    %22 = vector.broadcast %c0_i32_6 : i32 to vector<1x256xi32>
    %23 = arith.cmpi ne, %21, %22 : vector<1x256xi32>
    %c0_i32_7 = arith.constant 0 : i32
    %24 = vector.broadcast %c0_i32_7 : i32 to vector<1x256xi32>
    %25 = arith.cmpi slt, %21, %24 : vector<1x256xi32>
    %c0_i32_8 = arith.constant 0 : i32
    %26 = arith.cmpi slt, %19, %c0_i32_8 : i32
    %27 = vector.broadcast %26 : i1 to vector<1x256xi1>
    %28 = vector.broadcast %27 : vector<1x256xi1> to vector<1x256xi1>
    %29 = arith.xori %25, %28 : vector<1x256xi1>
    %30 = arith.andi %29, %23 : vector<1x256xi1>
    %31 = vector.broadcast %19 : i32 to vector<1x256xi32>
    %32 = arith.addi %21, %31 : vector<1x256xi32>
    %33 = arith.select %30, %32, %21 : vector<1x256xi1>, vector<1x256xi32>
    %c16_i32_9 = arith.constant 16 : i32
    %34 = vector.broadcast %c16_i32_9 : i32 to vector<1x256xi32>
    %35 = arith.cmpi sge, %17, %34 : vector<1x256xi32>
    %36 = arith.extui %35 : vector<1x256xi1> to vector<1x256xi32>
    %37 = arith.sitofp %36 : vector<1x256xi32> to vector<1x256xf32>
    %c240_i32 = arith.constant 240 : i32
    %38 = vector.broadcast %c240_i32 : i32 to vector<1x256xi32>
    %39 = arith.cmpi slt, %17, %38 : vector<1x256xi32>
    %40 = arith.extui %39 : vector<1x256xi1> to vector<1x256xi32>
    %41 = arith.sitofp %40 : vector<1x256xi32> to vector<1x256xf32>
    %c0_i32_10 = arith.constant 0 : i32
    %42 = vector.broadcast %c0_i32_10 : i32 to vector<1x256xi32>
    %43 = arith.cmpi sgt, %33, %42 : vector<1x256xi32>
    %44 = arith.extui %43 : vector<1x256xi1> to vector<1x256xi32>
    %45 = arith.sitofp %44 : vector<1x256xi32> to vector<1x256xf32>
    %c15_i32 = arith.constant 15 : i32
    %46 = vector.broadcast %c15_i32 : i32 to vector<1x256xi32>
    %47 = arith.cmpi slt, %33, %46 : vector<1x256xi32>
    %48 = arith.extui %47 : vector<1x256xi1> to vector<1x256xi32>
    %49 = arith.sitofp %48 : vector<1x256xi32> to vector<1x256xf32>
    %50 = arith.mulf %37, %45 : vector<1x256xf32>
    %51 = arith.mulf %37, %49 : vector<1x256xf32>
    %52 = arith.mulf %41, %45 : vector<1x256xf32>
    %53 = arith.mulf %41, %49 : vector<1x256xf32>
    %c17_i32 = arith.constant 17 : i32
    %54 = tpu.dynamic_rotate %0 by %c17_i32 dim 1 : vector<8x256xf32>, i32 -> vector<8x256xf32>
    %55 = vector.broadcast %50 : vector<1x256xf32> to vector<8x256xf32>
    %56 = arith.mulf %54, %55 : vector<8x256xf32>
    %c0_11 = arith.constant 0 : index
    %c0_12 = arith.constant 0 : index
    %57 = vector.load %arg9[%c0_11, %c0_12] : memref<72x256xf32, #tpu.memory_space<vmem>>, vector<8x256xf32>
    tpu.vector_store %arg9[%c0_11, %c0_12], %56 {strides = array<i32>} : memref<72x256xf32, #tpu.memory_space<vmem>>, vector<8x256xf32>,
    %c16_i32_13 = arith.constant 16 : i32
    %58 = tpu.dynamic_rotate %0 by %c16_i32_13 dim 1 : vector<8x256xf32>, i32 -> vector<8x256xf32>
    %59 = vector.broadcast %37 : vector<1x256xf32> to vector<8x256xf32>
    %60 = arith.mulf %58, %59 : vector<8x256xf32>
    %c8 = arith.constant 8 : index
    %c0_14 = arith.constant 0 : index
    %61 = vector.load %arg9[%c8, %c0_14] : memref<72x256xf32, #tpu.memory_space<vmem>>, vector<8x256xf32>
    tpu.vector_store %arg9[%c8, %c0_14], %60 {strides = array<i32>} : memref<72x256xf32, #tpu.memory_space<vmem>>, vector<8x256xf32>,
    %c15_i32_15 = arith.constant 15 : i32
    %62 = tpu.dynamic_rotate %0 by %c15_i32_15 dim 1 : vector<8x256xf32>, i32 -> vector<8x256xf32>
    %63 = vector.broadcast %51 : vector<1x256xf32> to vector<8x256xf32>
    %64 = arith.mulf %62, %63 : vector<8x256xf32>
    %c16 = arith.constant 16 : index
    %c0_16 = arith.constant 0 : index
    %65 = vector.load %arg9[%c16, %c0_16] : memref<72x256xf32, #tpu.memory_space<vmem>>, vector<8x256xf32>
    tpu.vector_store %arg9[%c16, %c0_16], %64 {strides = array<i32>} : memref<72x256xf32, #tpu.memory_space<vmem>>, vector<8x256xf32>,
    %c1_i32_17 = arith.constant 1 : i32
    %66 = tpu.dynamic_rotate %0 by %c1_i32_17 dim 1 : vector<8x256xf32>, i32 -> vector<8x256xf32>
    %67 = vector.broadcast %45 : vector<1x256xf32> to vector<8x256xf32>
    %68 = arith.mulf %66, %67 : vector<8x256xf32>
    %c24 = arith.constant 24 : index
    %c0_18 = arith.constant 0 : index
    %69 = vector.load %arg9[%c24, %c0_18] : memref<72x256xf32, #tpu.memory_space<vmem>>, vector<8x256xf32>
    tpu.vector_store %arg9[%c24, %c0_18], %68 {strides = array<i32>} : memref<72x256xf32, #tpu.memory_space<vmem>>, vector<8x256xf32>,
    %c32 = arith.constant 32 : index
    %c0_19 = arith.constant 0 : index
    %70 = vector.load %arg9[%c32, %c0_19] : memref<72x256xf32, #tpu.memory_space<vmem>>, vector<8x256xf32>
    tpu.vector_store %arg9[%c32, %c0_19], %0 {strides = array<i32>} : memref<72x256xf32, #tpu.memory_space<vmem>>, vector<8x256xf32>,
    %c255_i32 = arith.constant 255 : i32
    %71 = tpu.dynamic_rotate %0 by %c255_i32 dim 1 : vector<8x256xf32>, i32 -> vector<8x256xf32>
    %72 = vector.broadcast %49 : vector<1x256xf32> to vector<8x256xf32>
    %73 = arith.mulf %71, %72 : vector<8x256xf32>
    %c40 = arith.constant 40 : index
    %c0_20 = arith.constant 0 : index
    %74 = vector.load %arg9[%c40, %c0_20] : memref<72x256xf32, #tpu.memory_space<vmem>>, vector<8x256xf32>
    tpu.vector_store %arg9[%c40, %c0_20], %73 {strides = array<i32>} : memref<72x256xf32, #tpu.memory_space<vmem>>, vector<8x256xf32>,
    %c241_i32 = arith.constant 241 : i32
    %75 = tpu.dynamic_rotate %0 by %c241_i32 dim 1 : vector<8x256xf32>, i32 -> vector<8x256xf32>
    %76 = vector.broadcast %52 : vector<1x256xf32> to vector<8x256xf32>
    %77 = arith.mulf %75, %76 : vector<8x256xf32>
    %c48 = arith.constant 48 : index
    %c0_21 = arith.constant 0 : index
    %78 = vector.load %arg9[%c48, %c0_21] : memref<72x256xf32, #tpu.memory_space<vmem>>, vector<8x256xf32>
    tpu.vector_store %arg9[%c48, %c0_21], %77 {strides = array<i32>} : memref<72x256xf32, #tpu.memory_space<vmem>>, vector<8x256xf32>,
    %c240_i32_22 = arith.constant 240 : i32
    %79 = tpu.dynamic_rotate %0 by %c240_i32_22 dim 1 : vector<8x256xf32>, i32 -> vector<8x256xf32>
    %80 = vector.broadcast %41 : vector<1x256xf32> to vector<8x256xf32>
    %81 = arith.mulf %79, %80 : vector<8x256xf32>
    %c56 = arith.constant 56 : index
    %c0_23 = arith.constant 0 : index
    %82 = vector.load %arg9[%c56, %c0_23] : memref<72x256xf32, #tpu.memory_space<vmem>>, vector<8x256xf32>
    tpu.vector_store %arg9[%c56, %c0_23], %81 {strides = array<i32>} : memref<72x256xf32, #tpu.memory_space<vmem>>, vector<8x256xf32>,
    %c239_i32 = arith.constant 239 : i32
    %83 = tpu.dynamic_rotate %0 by %c239_i32 dim 1 : vector<8x256xf32>, i32 -> vector<8x256xf32>
    %84 = vector.broadcast %53 : vector<1x256xf32> to vector<8x256xf32>
    %85 = arith.mulf %83, %84 : vector<8x256xf32>
    %c64 = arith.constant 64 : index
    %c0_24 = arith.constant 0 : index
    %86 = vector.load %arg9[%c64, %c0_24] : memref<72x256xf32, #tpu.memory_space<vmem>>, vector<8x256xf32>
    tpu.vector_store %arg9[%c64, %c0_24], %85 {strides = array<i32>} : memref<72x256xf32, #tpu.memory_space<vmem>>, vector<8x256xf32>,
    %c0_25 = arith.constant 0 : index
    %c0_26 = arith.constant 0 : index
    %87 = vector.load %arg4[%c0_25, %c0_26] : memref<8x72xf32, #tpu.memory_space<vmem>>, vector<8x72xf32>
    %c0_27 = arith.constant 0 : index
    %c0_28 = arith.constant 0 : index
    %88 = vector.load %arg9[%c0_27, %c0_28] : memref<72x256xf32, #tpu.memory_space<vmem>>, vector<72x256xf32>
    %cst = arith.constant dense<0.000000e+00> : vector<8x256xf32>
    %89 = tpu.matmul %87, %88, %cst {dimension_numbers = #tpu.dot_dimension_numbers<[1], [0], [0], [1], [0, 0, 1, 1], [], []>} : vector<8x72xf32>, vector<72x256xf32>, vector<8x256xf32> -> vector<8x256xf32>
    %c0_29 = arith.constant 0 : index
    %c0_30 = arith.constant 0 : index
    %90 = vector.load %arg5[%c0_29, %c0_30] : memref<8x1xf32, #tpu.memory_space<vmem>>, vector<8x1xf32>
    %91 = vector.broadcast %90 : vector<8x1xf32> to vector<8x256xf32>
    %92 = arith.addf %89, %91 : vector<8x256xf32>
    %cst_31 = arith.constant 0.000000e+00 : f32
    %93 = vector.broadcast %cst_31 : f32 to vector<8x256xf32>
    %94 = arith.maximumf %92, %93 : vector<8x256xf32>
    %c17_i32_32 = arith.constant 17 : i32
    %95 = tpu.dynamic_rotate %94 by %c17_i32_32 dim 1 : vector<8x256xf32>, i32 -> vector<8x256xf32>
    %96 = vector.broadcast %50 : vector<1x256xf32> to vector<8x256xf32>
    %97 = arith.mulf %95, %96 : vector<8x256xf32>
    %c0_33 = arith.constant 0 : index
    %c0_34 = arith.constant 0 : index
    %98 = vector.load %arg9[%c0_33, %c0_34] : memref<72x256xf32, #tpu.memory_space<vmem>>, vector<8x256xf32>
    tpu.vector_store %arg9[%c0_33, %c0_34], %97 {strides = array<i32>} : memref<72x256xf32, #tpu.memory_space<vmem>>, vector<8x256xf32>,
    %c16_i32_35 = arith.constant 16 : i32
    %99 = tpu.dynamic_rotate %94 by %c16_i32_35 dim 1 : vector<8x256xf32>, i32 -> vector<8x256xf32>
    %100 = vector.broadcast %37 : vector<1x256xf32> to vector<8x256xf32>
    %101 = arith.mulf %99, %100 : vector<8x256xf32>
    %c8_36 = arith.constant 8 : index
    %c0_37 = arith.constant 0 : index
    %102 = vector.load %arg9[%c8_36, %c0_37] : memref<72x256xf32, #tpu.memory_space<vmem>>, vector<8x256xf32>
    tpu.vector_store %arg9[%c8_36, %c0_37], %101 {strides = array<i32>} : memref<72x256xf32, #tpu.memory_space<vmem>>, vector<8x256xf32>,
    %c15_i32_38 = arith.constant 15 : i32
    %103 = tpu.dynamic_rotate %94 by %c15_i32_38 dim 1 : vector<8x256xf32>, i32 -> vector<8x256xf32>
    %104 = vector.broadcast %51 : vector<1x256xf32> to vector<8x256xf32>
    %105 = arith.mulf %103, %104 : vector<8x256xf32>
    %c16_39 = arith.constant 16 : index
    %c0_40 = arith.constant 0 : index
    %106 = vector.load %arg9[%c16_39, %c0_40] : memref<72x256xf32, #tpu.memory_space<vmem>>, vector<8x256xf32>
    tpu.vector_store %arg9[%c16_39, %c0_40], %105 {strides = array<i32>} : memref<72x256xf32, #tpu.memory_space<vmem>>, vector<8x256xf32>,
    %c1_i32_41 = arith.constant 1 : i32
    %107 = tpu.dynamic_rotate %94 by %c1_i32_41 dim 1 : vector<8x256xf32>, i32 -> vector<8x256xf32>
    %108 = vector.broadcast %45 : vector<1x256xf32> to vector<8x256xf32>
    %109 = arith.mulf %107, %108 : vector<8x256xf32>
    %c24_42 = arith.constant 24 : index
    %c0_43 = arith.constant 0 : index
    %110 = vector.load %arg9[%c24_42, %c0_43] : memref<72x256xf32, #tpu.memory_space<vmem>>, vector<8x256xf32>
    tpu.vector_store %arg9[%c24_42, %c0_43], %109 {strides = array<i32>} : memref<72x256xf32, #tpu.memory_space<vmem>>, vector<8x256xf32>,
    %c32_44 = arith.constant 32 : index
    %c0_45 = arith.constant 0 : index
    %111 = vector.load %arg9[%c32_44, %c0_45] : memref<72x256xf32, #tpu.memory_space<vmem>>, vector<8x256xf32>
    tpu.vector_store %arg9[%c32_44, %c0_45], %94 {strides = array<i32>} : memref<72x256xf32, #tpu.memory_space<vmem>>, vector<8x256xf32>,
    %c255_i32_46 = arith.constant 255 : i32
    %112 = tpu.dynamic_rotate %94 by %c255_i32_46 dim 1 : vector<8x256xf32>, i32 -> vector<8x256xf32>
    %113 = vector.broadcast %49 : vector<1x256xf32> to vector<8x256xf32>
    %114 = arith.mulf %112, %113 : vector<8x256xf32>
    %c40_47 = arith.constant 40 : index
    %c0_48 = arith.constant 0 : index
    %115 = vector.load %arg9[%c40_47, %c0_48] : memref<72x256xf32, #tpu.memory_space<vmem>>, vector<8x256xf32>
    tpu.vector_store %arg9[%c40_47, %c0_48], %114 {strides = array<i32>} : memref<72x256xf32, #tpu.memory_space<vmem>>, vector<8x256xf32>,
    %c241_i32_49 = arith.constant 241 : i32
    %116 = tpu.dynamic_rotate %94 by %c241_i32_49 dim 1 : vector<8x256xf32>, i32 -> vector<8x256xf32>
    %117 = vector.broadcast %52 : vector<1x256xf32> to vector<8x256xf32>
    %118 = arith.mulf %116, %117 : vector<8x256xf32>
    %c48_50 = arith.constant 48 : index
    %c0_51 = arith.constant 0 : index
    %119 = vector.load %arg9[%c48_50, %c0_51] : memref<72x256xf32, #tpu.memory_space<vmem>>, vector<8x256xf32>
    tpu.vector_store %arg9[%c48_50, %c0_51], %118 {strides = array<i32>} : memref<72x256xf32, #tpu.memory_space<vmem>>, vector<8x256xf32>,
    %c240_i32_52 = arith.constant 240 : i32
    %120 = tpu.dynamic_rotate %94 by %c240_i32_52 dim 1 : vector<8x256xf32>, i32 -> vector<8x256xf32>
    %121 = vector.broadcast %41 : vector<1x256xf32> to vector<8x256xf32>
    %122 = arith.mulf %120, %121 : vector<8x256xf32>
    %c56_53 = arith.constant 56 : index
    %c0_54 = arith.constant 0 : index
    %123 = vector.load %arg9[%c56_53, %c0_54] : memref<72x256xf32, #tpu.memory_space<vmem>>, vector<8x256xf32>
    tpu.vector_store %arg9[%c56_53, %c0_54], %122 {strides = array<i32>} : memref<72x256xf32, #tpu.memory_space<vmem>>, vector<8x256xf32>,
    %c239_i32_55 = arith.constant 239 : i32
    %124 = tpu.dynamic_rotate %94 by %c239_i32_55 dim 1 : vector<8x256xf32>, i32 -> vector<8x256xf32>
    %125 = vector.broadcast %53 : vector<1x256xf32> to vector<8x256xf32>
    %126 = arith.mulf %124, %125 : vector<8x256xf32>
    %c64_56 = arith.constant 64 : index
    %c0_57 = arith.constant 0 : index
    %127 = vector.load %arg9[%c64_56, %c0_57] : memref<72x256xf32, #tpu.memory_space<vmem>>, vector<8x256xf32>
    tpu.vector_store %arg9[%c64_56, %c0_57], %126 {strides = array<i32>} : memref<72x256xf32, #tpu.memory_space<vmem>>, vector<8x256xf32>,
    %c0_58 = arith.constant 0 : index
    %c0_59 = arith.constant 0 : index
    %128 = vector.load %arg6[%c0_58, %c0_59] : memref<8x72xf32, #tpu.memory_space<vmem>>, vector<8x72xf32>
    %c0_60 = arith.constant 0 : index
    %c0_61 = arith.constant 0 : index
    %129 = vector.load %arg9[%c0_60, %c0_61] : memref<72x256xf32, #tpu.memory_space<vmem>>, vector<72x256xf32>
    %cst_62 = arith.constant dense<0.000000e+00> : vector<8x256xf32>
    %130 = tpu.matmul %128, %129, %cst_62 {dimension_numbers = #tpu.dot_dimension_numbers<[1], [0], [0], [1], [0, 0, 1, 1], [], []>} : vector<8x72xf32>, vector<72x256xf32>, vector<8x256xf32> -> vector<8x256xf32>
    %c0_63 = arith.constant 0 : index
    %c0_64 = arith.constant 0 : index
    %131 = vector.load %arg7[%c0_63, %c0_64] : memref<8x1xf32, #tpu.memory_space<vmem>>, vector<8x1xf32>
    %132 = vector.broadcast %131 : vector<8x1xf32> to vector<8x256xf32>
    %133 = arith.addf %130, %132 : vector<8x256xf32>
    %c0_65 = arith.constant 0 : index
    %134 = memref.load %arg1[%c0_65] : memref<2xf32, #tpu.memory_space<smem>>
    %c1 = arith.constant 1 : index
    %135 = memref.load %arg1[%c1] : memref<2xf32, #tpu.memory_space<smem>>
    %136 = vector.broadcast %134 : f32 to vector<8x256xf32>
    %137 = arith.mulf %136, %133 : vector<8x256xf32>
    %c0_66 = arith.constant 0 : index
    %c0_67 = arith.constant 0 : index
    %138 = vector.load %arg3[%c0_66, %c0_67] : memref<8x256xf32, #tpu.memory_space<vmem>>, vector<8x256xf32>
    %139 = arith.subf %138, %0 : vector<8x256xf32>
    %140 = vector.broadcast %135 : f32 to vector<8x256xf32>
    %141 = arith.mulf %140, %139 : vector<8x256xf32>
    %142 = arith.addf %137, %141 : vector<8x256xf32>
    %143 = arith.addf %142, %0 : vector<8x256xf32>
    %c0_68 = arith.constant 0 : index
    %c0_69 = arith.constant 0 : index
    %144 = vector.load %arg8[%c0_68, %c0_69] : memref<8x256xf32, #tpu.memory_space<vmem>>, vector<8x256xf32>
    tpu.vector_store %arg8[%c0_68, %c0_69], %143 {strides = array<i32>} : memref<8x256xf32, #tpu.memory_space<vmem>>, vector<8x256xf32>,
    return
  }
  func.func @transform_0(%arg0: i32) -> i32 {
    %c0_i32 = arith.constant 0 : i32
    %c0_i32_0 = arith.constant 0 : i32
    return %c0_i32 : i32
  }
  func.func @transform_1(%arg0: i32) -> (i32, i32) {
    %c0_i32 = arith.constant 0 : i32
    %c0_i32_0 = arith.constant 0 : i32
    return %c0_i32, %arg0 : i32, i32
  }
  func.func @transform_2(%arg0: i32) -> (i32, i32) {
    %c0_i32 = arith.constant 0 : i32
    %c0_i32_0 = arith.constant 0 : i32
    return %c0_i32, %arg0 : i32, i32
  }
  func.func @transform_3(%arg0: i32) -> (i32, i32) {
    %c0_i32 = arith.constant 0 : i32
    %c0_i32_0 = arith.constant 0 : i32
    %c0_i32_1 = arith.constant 0 : i32
    return %c0_i32, %c0_i32_0 : i32, i32
  }
  func.func @transform_4(%arg0: i32) -> (i32, i32) {
    %c0_i32 = arith.constant 0 : i32
    %c0_i32_0 = arith.constant 0 : i32
    %c0_i32_1 = arith.constant 0 : i32
    return %c0_i32, %c0_i32_0 : i32, i32
  }
  func.func @transform_5(%arg0: i32) -> (i32, i32) {
    %c0_i32 = arith.constant 0 : i32
    %c0_i32_0 = arith.constant 0 : i32
    %c0_i32_1 = arith.constant 0 : i32
    return %c0_i32, %c0_i32_0 : i32, i32
  }
  func.func @transform_6(%arg0: i32) -> (i32, i32) {
    %c0_i32 = arith.constant 0 : i32
    %c0_i32_0 = arith.constant 0 : i32
    %c0_i32_1 = arith.constant 0 : i32
    return %c0_i32, %c0_i32_0 : i32, i32
  }
  func.func @transform_7(%arg0: i32) -> (i32, i32) {
    %c0_i32 = arith.constant 0 : i32
    %c0_i32_0 = arith.constant 0 : i32
    return %c0_i32, %arg0 : i32, i32
  }
}

</mosaic_0001>

<llo_original>
// kernel: tpu_custom_call.1
$region0: #{tpu_custom_call.1}
  #allocation0 [shape = 'u32[]', space=smem, size = 0x4, offset = 0x4, fixed_abs, tag = 'smem constant byte address 0x4 - core index']
  #allocation1 [shape = 'u32[144,128]{1,0:T(1,128)}', space=vmem, size = 0x12000, scoped, tag = 'internal scratch']
  #allocation2 [shape = 'f32[72,256]{1,0:T(8,128)}', space=vmem, size = 0x12000, scoped, tag = 'scratch operand']
  %s0 = inlined_call_operand.vmem [shape: f32[2], index: 0, kind: input, shape index: {}]
  %s1 = inlined_call_operand.hbm [shape: f32[8,512], index: 1, kind: input, shape index: {}]
  %s2 = inlined_call_operand.hbm [shape: f32[8,512], index: 2, kind: input, shape index: {}]
  %s3 = inlined_call_operand.vmem [shape: f32[8,72], index: 3, kind: input, shape index: {}]
  %s4 = inlined_call_operand.vmem [shape: f32[8,1], index: 4, kind: input, shape index: {}]
  %s5 = inlined_call_operand.vmem [shape: f32[8,72], index: 5, kind: input, shape index: {}]
  %s6 = inlined_call_operand.vmem [shape: f32[8,1], index: 6, kind: input, shape index: {}]
  %s7 = inlined_call_operand.hbm [shape: f32[8,512], index: 7, kind: output, shape index: {}]
  %s8 = sld [smem:[#allocation0]]
  $region73: #{tpu_custom_call.1} parent=0
    _
  %s10 = ssub.s32 1, %s8
  %s11 = scalar_select 0, %s10, %s8
  $region1: #{tpu_custom_call.1} parent=0
    #allocation3 [shape = 'u8[512]{0}', space=smem, size = 0x200, scoped, tag = 'input window, operand 0, single buffered']
    #allocation4 [shape = 's32[2]{0}', space=sflag, size = 0x8, scoped, tag = 'scoped memory for tpu_custom_call.1']
    #allocation5 [shape = 's32[2]{0}', space=sflag, size = 0x8, scoped, tag = 'scoped memory for tpu_custom_call.1']
    #allocation6 [shape = 's32[2]{0}', space=sflag, size = 0x8, scoped, tag = 'scoped memory for tpu_custom_call.1']
    #allocation7 [shape = 'u8[16384]{0}', space=vmem, size = 0x4000, scoped, tag = 'input window, operand 1']
    #allocation8 [shape = 'u8[16384]{0}', space=vmem, size = 0x4000, scoped, tag = 'input window, operand 2']
    #allocation9 [shape = 's32[2]{0}', space=sflag, size = 0x8, scoped, tag = 'scoped memory for tpu_custom_call.1']
    #allocation10 [shape = 'u8[16384]{0}', space=vmem, size = 0x4000, scoped, tag = 'output window, operand 0']
    %12 = vsyncpa [#allocation6], 0
    %13 = vsyncpa [#allocation4], 0
    %s14 = scalar_lea.sflag [#allocation4], 1
    %15 = vsyncpa %s14, 0
    %16 = vsyncpa [#allocation9], 0
    %s17 = scalar_lea.sflag [#allocation9], 1
    %18 = vsyncpa %s17, 0
    %19 = vsyncpa [#allocation5], 0
    %s20 = scalar_lea.sflag [#allocation5], 1
    %21 = vsyncpa %s20, 0
    loop: start=0, step=1, limit=4
    $region2: #{tpu_custom_call.1} parent=1 // loop_pre_header
      _
    $region3: #{tpu_custom_call.1} parent=1 // loop_header
      %s23 = sphi 0, %s27
      %p24 = scmp.ge.s32.totalorder %s23, 4
      %s31 = sphi 0, %s31
      %s33 = sphi 0, %s31
      %s34 = sphi 0, %s33
      %s48 = sphi 0, %s34
      %s54 = sphi 0, %s56
      %s57 = sphi 0, %s54
      %s58 = sphi 0, %s57
      %s74 = sphi 0, %s58
      %s80 = sphi 0, %s82
      %s83 = sphi 0, %s80
      %s84 = sphi 0, %s83
      %s100 = sphi 0, %s84
      %s104 = sphi 0, %s104
      %s106 = sphi 0, %s104
      %s107 = sphi 0, %s106
      %s121 = sphi 0, %s107
      %s125 = sphi 0, %s125
      %s127 = sphi 0, %s125
      %s128 = sphi 0, %s127
      %s142 = sphi 0, %s128
      %s146 = sphi 0, %s146
      %s148 = sphi 0, %s146
      %s149 = sphi 0, %s148
      %s163 = sphi 0, %s149
      %s167 = sphi 0, %s167
      %s169 = sphi 0, %s167
      %s170 = sphi 0, %s169
      %s184 = sphi 0, %s170
      %s190 = sphi 0, %s192
      %s193 = sphi 0, %s190
      %s194 = sphi 0, %s193
      %s210 = sphi 0, %s194
    $region4: #{tpu_custom_call.1} parent=1 // loop_header_branch
      %26 = sbr.rel (%p24) target = $region8
    $region5: #{tpu_custom_call.1} parent=1 // loop_body
      %s28 = ssub.s32 %s23, 1
      %s29 = ssub.s32 %s23, 2
      %s30 = sadd.s32 %s23, 1
      %s32 = sadd.s32 %s31, 1
      %p35 = scmp.eq.s32.totalorder %s23, 1
      %p36 = scmp.ne.s32.totalorder %s31, %s33
      %p37 = scmp.eq.s32.totalorder %s23, 0
      %p38 = por %p36, %p37
      %p39 = scmp.ne.s32.totalorder %s31, %s33
      %p40 = scmp.eq.s32.totalorder %s28, 1
      %p41 = por %p39, %p40
      %p42 = scmp.ne.s32.totalorder %s33, %s34
      %p43 = scmp.eq.s32.totalorder %s28, 0
      %p44 = por %p42, %p43
      %p45 = scmp.ne.s32.totalorder %s33, %s34
      %p46 = scmp.eq.s32.totalorder %s29, 1
      %p47 = por %p45, %p46
      %p49 = scmp.ne.s32.totalorder %s34, %s48
      %p50 = scmp.eq.s32.totalorder %s29, 0
      %p51 = por %p49, %p50
      %s52 = ssub.s32 %s23, %s30
      %p53 = scmp.eq.s32.totalorder %s52, 0
      %s55 = sadd.s32 %s54, 1
      %s56 = scalar_select %p53, %s54, %s55
      %p59 = pneg %p53
      %p60 = scmp.eq.s32.totalorder %s23, 1
      %p61 = por %p59, %p60
      %p62 = scmp.ne.s32.totalorder %s54, %s57
      %p63 = scmp.eq.s32.totalorder %s23, 0
      %p64 = por %p62, %p63
      %p65 = scmp.ne.s32.totalorder %s54, %s57
      %p66 = scmp.eq.s32.totalorder %s28, 1
      %p67 = por %p65, %p66
      %p68 = scmp.ne.s32.totalorder %s57, %s58
      %p69 = scmp.eq.s32.totalorder %s28, 0
      %p70 = por %p68, %p69
      %p71 = scmp.ne.s32.totalorder %s57, %s58
      %p72 = scmp.eq.s32.totalorder %s29, 1
      %p73 = por %p71, %p72
      %p75 = scmp.ne.s32.totalorder %s58, %s74
      %p76 = scmp.eq.s32.totalorder %s29, 0
      %p77 = por %p75, %p76
      %s78 = ssub.s32 %s23, %s30
      %p79 = scmp.eq.s32.totalorder %s78, 0
      %s81 = sadd.s32 %s80, 1
      %s82 = scalar_select %p79, %s80, %s81
      %p85 = pneg %p79
      %p86 = scmp.eq.s32.totalorder %s23, 1
      %p87 = por %p85, %p86
      %p88 = scmp.ne.s32.totalorder %s80, %s83
      %p89 = scmp.eq.s32.totalorder %s23, 0
      %p90 = por %p88, %p89
      %p91 = scmp.ne.s32.totalorder %s80, %s83
      %p92 = scmp.eq.s32.totalorder %s28, 1
      %p93 = por %p91, %p92
      %p94 = scmp.ne.s32.totalorder %s83, %s84
      %p95 = scmp.eq.s32.totalorder %s28, 0
      %p96 = por %p94, %p95
      %p97 = scmp.ne.s32.totalorder %s83, %s84
      %p98 = scmp.eq.s32.totalorder %s29, 1
      %p99 = por %p97, %p98
      %p101 = scmp.ne.s32.totalorder %s84, %s100
      %p102 = scmp.eq.s32.totalorder %s29, 0
      %p103 = por %p101, %p102
      %s105 = sadd.s32 %s104, 1
      %p108 = scmp.eq.s32.totalorder %s23, 1
      %p109 = scmp.ne.s32.totalorder %s104, %s106
      %p110 = scmp.eq.s32.totalorder %s23, 0
      %p111 = por %p109, %p110
      %p112 = scmp.ne.s32.totalorder %s104, %s106
      %p113 = scmp.eq.s32.totalorder %s28, 1
      %p114 = por %p112, %p113
      %p115 = scmp.ne.s32.totalorder %s106, %s107
      %p116 = scmp.eq.s32.totalorder %s28, 0
      %p117 = por %p115, %p116
      %p118 = scmp.ne.s32.totalorder %s106, %s107
      %p119 = scmp.eq.s32.totalorder %s29, 1
      %p120 = por %p118, %p119
      %p122 = scmp.ne.s32.totalorder %s107, %s121
      %p123 = scmp.eq.s32.totalorder %s29, 0
      %p124 = por %p122, %p123
      %s126 = sadd.s32 %s125, 1
      %p129 = scmp.eq.s32.totalorder %s23, 1
      %p130 = scmp.ne.s32.totalorder %s125, %s127
      %p131 = scmp.eq.s32.totalorder %s23, 0
      %p132 = por %p130, %p131
      %p133 = scmp.ne.s32.totalorder %s125, %s127
      %p134 = scmp.eq.s32.totalorder %s28, 1
      %p135 = por %p133, %p134
      %p136 = scmp.ne.s32.totalorder %s127, %s128
      %p137 = scmp.eq.s32.totalorder %s28, 0
      %p138 = por %p136, %p137
      %p139 = scmp.ne.s32.totalorder %s127, %s128
      %p140 = scmp.eq.s32.totalorder %s29, 1
      %p141 = por %p139, %p140
      %p143 = scmp.ne.s32.totalorder %s128, %s142
      %p144 = scmp.eq.s32.totalorder %s29, 0
      %p145 = por %p143, %p144
      %s147 = sadd.s32 %s146, 1
      %p150 = scmp.eq.s32.totalorder %s23, 1
      %p151 = scmp.ne.s32.totalorder %s146, %s148
      %p152 = scmp.eq.s32.totalorder %s23, 0
      %p153 = por %p151, %p152
      %p154 = scmp.ne.s32.totalorder %s146, %s148
      %p155 = scmp.eq.s32.totalorder %s28, 1
      %p156 = por %p154, %p155
      %p157 = scmp.ne.s32.totalorder %s148, %s149
      %p158 = scmp.eq.s32.totalorder %s28, 0
      %p159 = por %p157, %p158
      %p160 = scmp.ne.s32.totalorder %s148, %s149
      %p161 = scmp.eq.s32.totalorder %s29, 1
      %p162 = por %p160, %p161
      %p164 = scmp.ne.s32.totalorder %s149, %s163
      %p165 = scmp.eq.s32.totalorder %s29, 0
      %p166 = por %p164, %p165
      %s168 = sadd.s32 %s167, 1
      %p171 = scmp.eq.s32.totalorder %s23, 1
      %p172 = scmp.ne.s32.totalorder %s167, %s169
      %p173 = scmp.eq.s32.totalorder %s23, 0
      %p174 = por %p172, %p173
      %p175 = scmp.ne.s32.totalorder %s167, %s169
      %p176 = scmp.eq.s32.totalorder %s28, 1
      %p177 = por %p175, %p176
      %p178 = scmp.ne.s32.totalorder %s169, %s170
      %p179 = scmp.eq.s32.totalorder %s28, 0
      %p180 = por %p178, %p179
      %p181 = scmp.ne.s32.totalorder %s169, %s170
      %p182 = scmp.eq.s32.totalorder %s29, 1
      %p183 = por %p181, %p182
      %p185 = scmp.ne.s32.totalorder %s170, %s184
      %p186 = scmp.eq.s32.totalorder %s29, 0
      %p187 = por %p185, %p186
      %s188 = ssub.s32 %s23, %s30
      %p189 = scmp.eq.s32.totalorder %s188, 0
      %s191 = sadd.s32 %s190, 1
      %s192 = scalar_select %p189, %s190, %s191
      %p195 = pneg %p189
      %p196 = scmp.eq.s32.totalorder %s23, 1
      %p197 = por %p195, %p196
      %p198 = scmp.ne.s32.totalorder %s190, %s193
      %p199 = scmp.eq.s32.totalorder %s23, 0
      %p200 = por %p198, %p199
      %p201 = scmp.ne.s32.totalorder %s190, %s193
      %p202 = scmp.eq.s32.totalorder %s28, 1
      %p203 = por %p201, %p202
      %p204 = scmp.ne.s32.totalorder %s193, %s194
      %p205 = scmp.eq.s32.totalorder %s28, 0
      %p206 = por %p204, %p205
      %p207 = scmp.ne.s32.totalorder %s193, %s194
      %p208 = scmp.eq.s32.totalorder %s29, 1
      %p209 = por %p207, %p208
      %p211 = scmp.ne.s32.totalorder %s194, %s210
      %p212 = scmp.eq.s32.totalorder %s29, 0
      %p213 = por %p211, %p212
      %p214 = scmp.le.s32.totalorder 1, %s23
      %p215 = scmp.lt.s32.totalorder %s23, 3
      %p216 = pnand %p214, %p215
      %p217 = pneg %p216
      // Predicated region
      $region9: #{tpu_custom_call.1} parent=5 // pred_check
        _
      $region10: #{tpu_custom_call.1} parent=5 // pred_check_branch
        %219 = sbr.rel (%p216) target = $region12
      $region11: #{tpu_custom_call.1} parent=5 // pred_region
        %s220 = ssub.s32 %s23, 1
        // Predicated region
        $region13: #{tpu_custom_call.1} parent=11 // pred_check
          %p221 = pneg %p44
        $region14: #{tpu_custom_call.1} parent=11 // pred_check_branch
          %223 = sbr.rel (%p221) target = $region16
        $region15: #{tpu_custom_call.1} parent=11 // pred_region
          %s225 = ssub.s32 16, 16
          %226 = vsyncadd [#allocation6], %s225
          %s228 = sshll.u32 %s0, 4
          %s229 = int_to_ptr.vmem [resolvable:$true] %s228
          %231 = dma.vmem_to_smem %s229, 16, [#allocation3], [#allocation6]
        $region16: #{tpu_custom_call.1} parent=11 // pred_fallthru
          _
        // Predicated region
        $region17: #{tpu_custom_call.1} parent=11 // pred_check
          %p232 = pneg %p117
        $region18: #{tpu_custom_call.1} parent=11 // pred_check_branch
          %234 = sbr.rel (%p232) target = $region20
        $region19: #{tpu_custom_call.1} parent=11 // pred_region
          _
        $region20: #{tpu_custom_call.1} parent=11 // pred_fallthru
          _
        // Predicated region
        $region21: #{tpu_custom_call.1} parent=11 // pred_check
          %p235 = pneg %p138
        $region22: #{tpu_custom_call.1} parent=11 // pred_check_branch
          %237 = sbr.rel (%p235) target = $region24
        $region23: #{tpu_custom_call.1} parent=11 // pred_region
          _
        $region24: #{tpu_custom_call.1} parent=11 // pred_fallthru
          _
        // Predicated region
        $region25: #{tpu_custom_call.1} parent=11 // pred_check
          %p238 = pneg %p159
        $region26: #{tpu_custom_call.1} parent=11 // pred_check_branch
          %240 = sbr.rel (%p238) target = $region28
        $region27: #{tpu_custom_call.1} parent=11 // pred_region
          _
        $region28: #{tpu_custom_call.1} parent=11 // pred_fallthru
          _
        // Predicated region
        $region29: #{tpu_custom_call.1} parent=11 // pred_check
          %p241 = pneg %p180
        $region30: #{tpu_custom_call.1} parent=11 // pred_check_branch
          %243 = sbr.rel (%p241) target = $region32
        $region31: #{tpu_custom_call.1} parent=11 // pred_region
          _
        $region32: #{tpu_custom_call.1} parent=11 // pred_fallthru
          _
      $region12: #{tpu_custom_call.1} parent=5 // pred_fallthru
        _
      %p244 = scmp.lt.s32.totalorder %s23, 2
      // Predicated region
      $region33: #{tpu_custom_call.1} parent=5 // pred_check
        %p245 = pneg %p244
      $region34: #{tpu_custom_call.1} parent=5 // pred_check_branch
        %247 = sbr.rel (%p245) target = $region36
      $region35: #{tpu_custom_call.1} parent=5 // pred_region
        // Predicated region
        $region37: #{tpu_custom_call.1} parent=35 // pred_check
          %p248 = pneg %p64
        $region38: #{tpu_custom_call.1} parent=35 // pred_check_branch
          %250 = sbr.rel (%p248) target = $region40
        $region39: #{tpu_custom_call.1} parent=35 // pred_region
          %s251 = sand.u32 %s54, 1
          %s252 = scalar_lea.sflag [#allocation4], %s251
          %s253 = sand.u32 %s54, 1
          %s254 = smul.addr %s253, 16
          %s255 = scalar_lea.vmem [#allocation7], %s254
          %s256 = smul.u32 2, %s23
          %s258 = ssub.s32 256, 256
          %259 = vsyncadd %s252, %s258
          %s260 = smul.addr %s256, 128
          %s261 = scalar_lea.hbm %s1, %s260
          %s263 = sshll.u32 %s255, 4
          %s264 = int_to_ptr.vmem [resolvable:$true] %s263
          %266 = dma.hbm_to_vmem [thread:$0]  %s261, 256, %s264, %s252
        $region40: #{tpu_custom_call.1} parent=35 // pred_fallthru
          _
        // Predicated region
        $region41: #{tpu_custom_call.1} parent=35 // pred_check
          %p267 = pneg %p90
        $region42: #{tpu_custom_call.1} parent=35 // pred_check_branch
          %269 = sbr.rel (%p267) target = $region44
        $region43: #{tpu_custom_call.1} parent=35 // pred_region
          %s270 = sand.u32 %s80, 1
          %s271 = scalar_lea.sflag [#allocation9], %s270
          %s272 = sand.u32 %s80, 1
          %s273 = smul.addr %s272, 16
          %s274 = scalar_lea.vmem [#allocation8], %s273
          %s275 = smul.u32 2, %s23
          %s277 = ssub.s32 256, 256
          %278 = vsyncadd %s271, %s277
          %s279 = smul.addr %s275, 128
          %s280 = scalar_lea.hbm %s2, %s279
          %s282 = sshll.u32 %s274, 4
          %s283 = int_to_ptr.vmem [resolvable:$true] %s282
          %285 = dma.hbm_to_vmem [thread:$0]  %s280, 256, %s283, %s271
        $region44: #{tpu_custom_call.1} parent=35 // pred_fallthru
          _
      $region36: #{tpu_custom_call.1} parent=5 // pred_fallthru
        _
      %p286 = scmp.le.s32.totalorder 1, %s23
      %p287 = scmp.lt.s32.totalorder %s23, 3
      %p288 = pnand %p286, %p287
      %p289 = pneg %p288
      // Predicated region
      $region45: #{tpu_custom_call.1} parent=5 // pred_check
        _
      $region46: #{tpu_custom_call.1} parent=5 // pred_check_branch
        %291 = sbr.rel (%p288) target = $region48
      $region47: #{tpu_custom_call.1} parent=5 // pred_region
        %s292 = ssub.s32 %s23, 1
        // Predicated region
        $region49: #{tpu_custom_call.1} parent=47 // pred_check
          %p293 = pneg %p44
        $region50: #{tpu_custom_call.1} parent=47 // pred_check_branch
          %295 = sbr.rel (%p293) target = $region52
        $region51: #{tpu_custom_call.1} parent=47 // pred_region
          %296 = dma.done [#allocation6], 16
        $region52: #{tpu_custom_call.1} parent=47 // pred_fallthru
          _
        %s297 = sand.u32 %s57, 1
        %s298 = scalar_lea.sflag [#allocation4], %s297
        %s299 = sand.u32 %s57, 1
        %s300 = smul.addr %s299, 16
        %s301 = scalar_lea.vmem [#allocation7], %s300
        // Predicated region
        $region53: #{tpu_custom_call.1} parent=47 // pred_check
          %p302 = pneg %p70
        $region54: #{tpu_custom_call.1} parent=47 // pred_check_branch
          %304 = sbr.rel (%p302) target = $region56
        $region55: #{tpu_custom_call.1} parent=47 // pred_region
          %305 = dma.done %s298, 256
        $region56: #{tpu_custom_call.1} parent=47 // pred_fallthru
          _
        %s306 = sand.u32 %s83, 1
        %s307 = scalar_lea.sflag [#allocation9], %s306
        %s308 = sand.u32 %s83, 1
        %s309 = smul.addr %s308, 16
        %s310 = scalar_lea.vmem [#allocation8], %s309
        // Predicated region
        $region57: #{tpu_custom_call.1} parent=47 // pred_check
          %p311 = pneg %p96
        $region58: #{tpu_custom_call.1} parent=47 // pred_check_branch
          %313 = sbr.rel (%p311) target = $region60
        $region59: #{tpu_custom_call.1} parent=47 // pred_region
          %314 = dma.done %s307, 256
        $region60: #{tpu_custom_call.1} parent=47 // pred_fallthru
          _
        %315 = sfence
        %p316 = pneg %p44
        %p317 = pneg %p41
        %s318 = sand.u32 %s57, 1
        %s319 = scalar_lea.sflag [#allocation4], %s318
        %s320 = sand.u32 %s57, 1
        %s321 = smul.addr %s320, 16
        %s322 = scalar_lea.vmem [#allocation7], %s321
        %p323 = pneg %p70
        %p324 = pneg %p67
        %s325 = sand.u32 %s83, 1
        %s326 = scalar_lea.sflag [#allocation9], %s325
        %s327 = sand.u32 %s83, 1
        %s328 = smul.addr %s327, 16
        %s329 = scalar_lea.vmem [#allocation8], %s328
        %p330 = pneg %p96
        %p331 = pneg %p93
        %p332 = pneg %p117
        %p333 = pneg %p114
        %p334 = pneg %p138
        %p335 = pneg %p135
        %p336 = pneg %p159
        %p337 = pneg %p156
        %p338 = pneg %p180
        %p339 = pneg %p177
        %p340 = pneg %p206
        %p341 = pneg %p203
        %s342 = sand.u32 %s193, 1
        %s343 = scalar_lea.sflag [#allocation5], %s342
        %s344 = sand.u32 %s193, 1
        %s345 = smul.addr %s344, 16
        %s346 = scalar_lea.vmem [#allocation10], %s345
        %s347 = smul.u32 2, %s28
        %s348 = smul.u32 2, %s28
        %s349 = smul.u32 2, %s28
        %v350 = vld [vmem:[%s301] sm:$0xff]
        %v351 = vld [vmem:[%s301 + $0x8] sm:$0xff]
        %v352 = vlaneseq
        %v353 = vand.u32 %v352, 127
        %v354 = vadd.s32 %v353, 128
        %vm355 = vcmp.lt.s32.totalorder %v353, 0
        %v356 = vsub.s32 0, %v353
        %v357 = vsel %vm355, %v356, %v353
        %v358 = vshrl.u32 %v357, 8
        %v359 = vand.u32 %v357, 255
        %v360 = vsub.s32 0, %v359
        %v361 = vsel %vm355, %v360, %v359
        %vm362 = vcmp.lt.s32.totalorder %v354, 0
        %v363 = vsub.s32 0, %v354
        %v364 = vsel %vm362, %v363, %v354
        %v365 = vshrl.u32 %v364, 8
        %v366 = vand.u32 %v364, 255
        %v367 = vsub.s32 0, %v366
        %v368 = vsel %vm362, %v367, %v366
        %vm369 = vcmp.ne.s32.totalorder %v361, 0
        %vm370 = vcmp.ne.s32.totalorder %v368, 0
        %vm371 = vcmp.lt.s32.totalorder %v361, 0
        %vm372 = vcmp.lt.s32.totalorder %v368, 0
        %vm373 = vmand %vm371, %vm369
        %vm374 = vmand %vm372, %vm370
        %v375 = vadd.s32 %v361, 256
        %v376 = vadd.s32 %v368, 256
        %v377 = vsel %vm373, %v375, %v361
        %v378 = vsel %vm374, %v376, %v368
        %vm379 = vcmp.lt.s32.totalorder %v353, 0
        %v380 = vsub.s32 0, %v353
        %v381 = vsel %vm379, %v380, %v353
        %v382 = vshrl.u32 %v381, 4
        %v383 = vand.u32 %v381, 15
        %v384 = vsub.s32 0, %v383
        %v385 = vsel %vm379, %v384, %v383
        %vm386 = vcmp.lt.s32.totalorder %v354, 0
        %v387 = vsub.s32 0, %v354
        %v388 = vsel %vm386, %v387, %v354
        %v389 = vshrl.u32 %v388, 4
        %v390 = vand.u32 %v388, 15
        %v391 = vsub.s32 0, %v390
        %v392 = vsel %vm386, %v391, %v390
        %vm393 = vcmp.ne.s32.totalorder %v385, 0
        %vm394 = vcmp.ne.s32.totalorder %v392, 0
        %vm395 = vcmp.lt.s32.totalorder %v385, 0
        %vm396 = vcmp.lt.s32.totalorder %v392, 0
        %vm397 = vmand %vm395, %vm393
        %vm398 = vmand %vm396, %vm394
        %v399 = vadd.s32 %v385, 16
        %v400 = vadd.s32 %v392, 16
        %v401 = vsel %vm397, %v399, %v385
        %v402 = vsel %vm398, %v400, %v392
        %vm403 = vcmp.ge.s32.totalorder %v377, 16
        %vm404 = vcmp.ge.s32.totalorder %v378, 16
        %v405 = vsel %vm403, 1, 0
        %v406 = vsel %vm404, 1, 0
        %v407 = vcvt.s32.f32 %v405
        %v408 = vcvt.s32.f32 %v406
        %vm409 = vcmp.lt.s32.totalorder %v377, 240
        %vm410 = vcmp.lt.s32.totalorder %v378, 240
        %v411 = vsel %vm409, 1, 0
        %v412 = vsel %vm410, 1, 0
        %v413 = vcvt.s32.f32 %v411
        %v414 = vcvt.s32.f32 %v412
        %vm415 = vcmp.gt.s32.totalorder %v401, 0
        %vm416 = vcmp.gt.s32.totalorder %v402, 0
        %v417 = vsel %vm415, 1, 0
        %v418 = vsel %vm416, 1, 0
        %v419 = vcvt.s32.f32 %v417
        %v420 = vcvt.s32.f32 %v418
        %vm421 = vcmp.lt.s32.totalorder %v401, 15
        %vm422 = vcmp.lt.s32.totalorder %v402, 15
        %v423 = vsel %vm421, 1, 0
        %v424 = vsel %vm422, 1, 0
        %v425 = vcvt.s32.f32 %v423
        %v426 = vcvt.s32.f32 %v424
        %v427 = vmul.f32 %v407, %v419
        %v428 = vmul.f32 %v408, %v420
        %v429 = vmul.f32 %v407, %v425
        %v430 = vmul.f32 %v408, %v426
        %v431 = vmul.f32 %v413, %v419
        %v432 = vmul.f32 %v414, %v420
        %v433 = vmul.f32 %v413, %v425
        %v434 = vmul.f32 %v414, %v426
        %435 = vrot.lane.b32.xlu0 %v350, 17
        %v436 = vpop.permute.xlu0 %435
        %437 = vrot.lane.b32.xlu0 %v351, 17
        %v438 = vpop.permute.xlu0 %437
        %vm439 = vcmp.lt.s32.totalorder %v353, 17
        %v440 = vsel %vm439, %v436, %v438
        %v441 = vsel %vm439, %v438, %v436
        %v442 = vmul.f32 %v441, %v427
        %v443 = vmul.f32 %v440, %v428
        %444 = vst [vmem:[#allocation2] sm:$0xff] %v442
        %445 = vst [vmem:[#allocation2 + $0x8] sm:$0xff] %v443
        %446 = vrot.lane.b32.xlu0 %v350, 16
        %v447 = vpop.permute.xlu0 %446
        %448 = vrot.lane.b32.xlu0 %v351, 16
        %v449 = vpop.permute.xlu0 %448
        %vm450 = vcmp.lt.s32.totalorder %v353, 16
        %v451 = vsel %vm450, %v447, %v449
        %v452 = vsel %vm450, %v449, %v447
        %v453 = vmul.f32 %v452, %v407
        %v454 = vmul.f32 %v451, %v408
        %455 = vst [vmem:[#allocation2 + $0x10] sm:$0xff] %v453
        %456 = vst [vmem:[#allocation2 + $0x18] sm:$0xff] %v454
        %457 = vrot.lane.b32.xlu0 %v350, 15
        %v458 = vpop.permute.xlu0 %457
        %459 = vrot.lane.b32.xlu0 %v351, 15
        %v460 = vpop.permute.xlu0 %459
        %vm461 = vcmp.lt.s32.totalorder %v353, 15
        %v462 = vsel %vm461, %v458, %v460
        %v463 = vsel %vm461, %v460, %v458
        %v464 = vmul.f32 %v463, %v429
        %v465 = vmul.f32 %v462, %v430
        %466 = vst [vmem:[#allocation2 + $0x20] sm:$0xff] %v464
        %467 = vst [vmem:[#allocation2 + $0x28] sm:$0xff] %v465
        %468 = vrot.lane.b32.xlu0 %v350, 1
        %v469 = vpop.permute.xlu0 %468
        %470 = vrot.lane.b32.xlu0 %v351, 1
        %v471 = vpop.permute.xlu0 %470
        %vm472 = vcmp.lt.s32.totalorder %v353, 1
        %v473 = vsel %vm472, %v469, %v471
        %v474 = vsel %vm472, %v471, %v469
        %v475 = vmul.f32 %v474, %v419
        %v476 = vmul.f32 %v473, %v420
        %477 = vst [vmem:[#allocation2 + $0x30] sm:$0xff] %v475
        %478 = vst [vmem:[#allocation2 + $0x38] sm:$0xff] %v476
        %479 = vst [vmem:[#allocation2 + $0x40] sm:$0xff] %v350
        %480 = vst [vmem:[#allocation2 + $0x48] sm:$0xff] %v351
        %481 = vrot.lane.b32.xlu0 %v350, 127
        %v482 = vpop.permute.xlu0 %481
        %483 = vrot.lane.b32.xlu0 %v351, 127
        %v484 = vpop.permute.xlu0 %483
        %vm485 = vcmp.lt.s32.totalorder %v353, 127
        %v486 = vsel %vm485, %v482, %v484
        %v487 = vsel %vm485, %v484, %v482
        %v488 = vmul.f32 %v486, %v425
        %v489 = vmul.f32 %v487, %v426
        %490 = vst [vmem:[#allocation2 + $0x50] sm:$0xff] %v488
        %491 = vst [vmem:[#allocation2 + $0x58] sm:$0xff] %v489
        %492 = vrot.lane.b32.xlu0 %v350, 113
        %v493 = vpop.permute.xlu0 %492
        %494 = vrot.lane.b32.xlu0 %v351, 113
        %v495 = vpop.permute.xlu0 %494
        %vm496 = vcmp.lt.s32.totalorder %v353, 113
        %v497 = vsel %vm496, %v493, %v495
        %v498 = vsel %vm496, %v495, %v493
        %v499 = vmul.f32 %v497, %v431
        %v500 = vmul.f32 %v498, %v432
        %501 = vst [vmem:[#allocation2 + $0x60] sm:$0xff] %v499
        %502 = vst [vmem:[#allocation2 + $0x68] sm:$0xff] %v500
        %503 = vrot.lane.b32.xlu0 %v350, 112
        %v504 = vpop.permute.xlu0 %503
        %505 = vrot.lane.b32.xlu0 %v351, 112
        %v506 = vpop.permute.xlu0 %505
        %vm507 = vcmp.lt.s32.totalorder %v353, 112
        %v508 = vsel %vm507, %v504, %v506
        %v509 = vsel %vm507, %v506, %v504
        %v510 = vmul.f32 %v508, %v413
        %v511 = vmul.f32 %v509, %v414
        %512 = vst [vmem:[#allocation2 + $0x70] sm:$0xff] %v510
        %513 = vst [vmem:[#allocation2 + $0x78] sm:$0xff] %v511
        %514 = vrot.lane.b32.xlu0 %v350, 111
        %v515 = vpop.permute.xlu0 %514
        %516 = vrot.lane.b32.xlu0 %v351, 111
        %v517 = vpop.permute.xlu0 %516
        %vm518 = vcmp.lt.s32.totalorder %v353, 111
        %v519 = vsel %vm518, %v515, %v517
        %v520 = vsel %vm518, %v517, %v515
        %v521 = vmul.f32 %v519, %v433
        %v522 = vmul.f32 %v520, %v434
        %523 = vst [vmem:[#allocation2 + $0x80] sm:$0xff] %v521
        %524 = vst [vmem:[#allocation2 + $0x88] sm:$0xff] %v522
        %v525 = vld [vmem:[%s3] sm:$0xff]
        %v526 = vld [vmem:[#allocation2] sm:$0xff]
        %v527 = vld [vmem:[#allocation2 + $0x8] sm:$0xff]
        %v528 = vld [vmem:[#allocation2 + $0x10] sm:$0xff]
        %v529 = vld [vmem:[#allocation2 + $0x18] sm:$0xff]
        %v530 = vld [vmem:[#allocation2 + $0x20] sm:$0xff]
        %v531 = vld [vmem:[#allocation2 + $0x28] sm:$0xff]
        %v532 = vld [vmem:[#allocation2 + $0x30] sm:$0xff]
        %v533 = vld [vmem:[#allocation2 + $0x38] sm:$0xff]
        %v534 = vld [vmem:[#allocation2 + $0x40] sm:$0xff]
        %v535 = vld [vmem:[#allocation2 + $0x48] sm:$0xff]
        %v536 = vld [vmem:[#allocation2 + $0x50] sm:$0xff]
        %v537 = vld [vmem:[#allocation2 + $0x58] sm:$0xff]
        %v538 = vld [vmem:[#allocation2 + $0x60] sm:$0xff]
        %v539 = vld [vmem:[#allocation2 + $0x68] sm:$0xff]
        %v540 = vld [vmem:[#allocation2 + $0x70] sm:$0xff]
        %v541 = vld [vmem:[#allocation2 + $0x78] sm:$0xff]
        %v542 = vld [vmem:[#allocation2 + $0x80] sm:$0xff]
        %v543 = vld [vmem:[#allocation2 + $0x88] sm:$0xff]
        %v544 = vld [vmem:[%s4] sm:$0xff]
        %546 = vset.pattern.permute.xlu0 0
        %547 = vperm.xlu0 %546, %v544
        %v548 = vpop.permute.xlu0 %547
        %vm550 = vcmask 588800
        %v552 = vsel %vm550, %v525, 0
        %554 = vmatprep.subr.mxu0 0.0
        %555 = vmatpush1.msra.mxu0 0.0
        %556 = vmatprep.subr.mxu0 0.0
        %557 = vmatpush1.msra.mxu0 0.0
        %558 = vmatprep.subr.mxu0 0.0
        %559 = vmatpush1.msra.mxu0 0.0
        %560 = vmatprep.subr.mxu0 0.0
        %561 = vmatpush1.msra.mxu0 0.0
        %562 = vmatprep.subr.mxu0 0.0
        %563 = vmatpush1.msra.mxu0 0.0
        %564 = vmatprep.subr.mxu0 0.0
        %565 = vmatpush1.msra.mxu0 0.0
        %566 = vmatprep.subr.mxu0 0.0
        %567 = vmatpush1.msra.mxu0 0.0
        %568 = vmatprep.subr.mxu0 %v543
        %569 = vmatpush1.msra.mxu0 %v542
        %570 = vmatprep.subr.mxu0 %v541
        %571 = vmatpush1.msra.mxu0 %v540
        %572 = vmatprep.subr.mxu0 %v539
        %573 = vmatpush1.msra.mxu0 %v538
        %574 = vmatprep.subr.mxu0 %v537
        %575 = vmatpush1.msra.mxu0 %v536
        %576 = vmatprep.subr.mxu0 %v535
        %577 = vmatpush1.msra.mxu0 %v534
        %578 = vmatprep.subr.mxu0 %v533
        %579 = vmatpush1.msra.mxu0 %v532
        %580 = vmatprep.subr.mxu0 %v531
        %581 = vmatpush1.msra.mxu0 %v530
        %582 = vmatprep.subr.mxu0 %v529
        %583 = vmatpush1.msra.mxu0 %v528
        %584 = vmatprep.subr.mxu0 %v527
        %585 = vmatpush1.msra.mxu0 %v526
        %586 = vmatprep.subr.mxu0 0.0
        %587 = vmatpush2.msra.mxu0 0.0
        %588 = vmatprep.subr.mxu0 0.0
        %589 = vmatpush2.msra.mxu0 0.0
        %590 = vmatprep.subr.mxu0 0.0
        %591 = vmatpush2.msra.mxu0 0.0
        %592 = vmatprep.subr.mxu0 0.0
        %593 = vmatpush2.msra.mxu0 0.0
        %594 = vmatprep.subr.mxu0 0.0
        %595 = vmatpush2.msra.mxu0 0.0
        %596 = vmatprep.subr.mxu0 0.0
        %597 = vmatpush2.msra.mxu0 0.0
        %598 = vmatprep.subr.mxu0 0.0
        %599 = vmatpush2.msra.mxu0 0.0
        %600 = vmatprep.subr.mxu0 0.0
        %601 = vmatpush2.msra.mxu0 0.0
        %602 = vmatprep.subr.mxu0 0.0
        %603 = vmatpush2.msra.mxu0 0.0
        %604 = vmatprep.subr.mxu0 0.0
        %605 = vmatpush2.msra.mxu0 0.0
        %606 = vmatprep.subr.mxu0 0.0
        %607 = vmatpush2.msra.mxu0 0.0
        %608 = vmatprep.subr.mxu0 0.0
        %609 = vmatpush2.msra.mxu0 0.0
        %610 = vmatprep.subr.mxu0 0.0
        %611 = vmatpush2.msra.mxu0 0.0
        %612 = vmatprep.subr.mxu0 0.0
        %613 = vmatpush2.msra.mxu0 0.0
        %614 = vmatprep.subr.mxu0 0.0
        %615 = vmatpush2.msra.mxu0 0.0
        %616 = vmatprep.subr.mxu0 0.0
        %617 = vmatpush2.msra.mxu0 0.0
        %618 = vmatprep.mubr.f32.mxu0 0.0
        %619 = vmatmul.mubr.f32.gmra.mxu0 %v552
        %v620 = vpop.f32.mrf.mxu0
        %v621 = vadd.f32 %v548, %v620
        %v622 = vpop.f32.mrf.mxu0
        %v623 = vadd.f32 %v548, %v622
        %624 = vdwg.mxu0
        %v625 = vmax.f32 %v621, 0.0
        %v626 = vmax.f32 %v623, 0.0
        %627 = vrot.lane.b32.xlu0 %v625, 17
        %v628 = vpop.permute.xlu0 %627
        %629 = vrot.lane.b32.xlu0 %v626, 17
        %v630 = vpop.permute.xlu0 %629
        %v631 = vsel %vm439, %v628, %v630
        %v632 = vsel %vm439, %v630, %v628
        %v633 = vmul.f32 %v632, %v427
        %v634 = vmul.f32 %v631, %v428
        %635 = vst [vmem:[#allocation2] sm:$0xff] %v633
        %636 = vst [vmem:[#allocation2 + $0x8] sm:$0xff] %v634
        %637 = vrot.lane.b32.xlu0 %v625, 16
        %v638 = vpop.permute.xlu0 %637
        %639 = vrot.lane.b32.xlu0 %v626, 16
        %v640 = vpop.permute.xlu0 %639
        %v641 = vsel %vm450, %v638, %v640
        %v642 = vsel %vm450, %v640, %v638
        %v643 = vmul.f32 %v642, %v407
        %v644 = vmul.f32 %v641, %v408
        %645 = vst [vmem:[#allocation2 + $0x10] sm:$0xff] %v643
        %646 = vst [vmem:[#allocation2 + $0x18] sm:$0xff] %v644
        %647 = vrot.lane.b32.xlu0 %v625, 15
        %v648 = vpop.permute.xlu0 %647
        %649 = vrot.lane.b32.xlu0 %v626, 15
        %v650 = vpop.permute.xlu0 %649
        %v651 = vsel %vm461, %v648, %v650
        %v652 = vsel %vm461, %v650, %v648
        %v653 = vmul.f32 %v652, %v429
        %v654 = vmul.f32 %v651, %v430
        %655 = vst [vmem:[#allocation2 + $0x20] sm:$0xff] %v653
        %656 = vst [vmem:[#allocation2 + $0x28] sm:$0xff] %v654
        %657 = vrot.lane.b32.xlu0 %v625, 1
        %v658 = vpop.permute.xlu0 %657
        %659 = vrot.lane.b32.xlu0 %v626, 1
        %v660 = vpop.permute.xlu0 %659
        %v661 = vsel %vm472, %v658, %v660
        %v662 = vsel %vm472, %v660, %v658
        %v663 = vmul.f32 %v662, %v419
        %v664 = vmul.f32 %v661, %v420
        %665 = vst [vmem:[#allocation2 + $0x30] sm:$0xff] %v663
        %666 = vst [vmem:[#allocation2 + $0x38] sm:$0xff] %v664
        %667 = vst [vmem:[#allocation2 + $0x40] sm:$0xff] %v625
        %668 = vst [vmem:[#allocation2 + $0x48] sm:$0xff] %v626
        %669 = vrot.lane.b32.xlu0 %v625, 127
        %v670 = vpop.permute.xlu0 %669
        %671 = vrot.lane.b32.xlu0 %v626, 127
        %v672 = vpop.permute.xlu0 %671
        %v673 = vsel %vm485, %v670, %v672
        %v674 = vsel %vm485, %v672, %v670
        %v675 = vmul.f32 %v673, %v425
        %v676 = vmul.f32 %v674, %v426
        %677 = vst [vmem:[#allocation2 + $0x50] sm:$0xff] %v675
        %678 = vst [vmem:[#allocation2 + $0x58] sm:$0xff] %v676
        %679 = vrot.lane.b32.xlu0 %v625, 113
        %v680 = vpop.permute.xlu0 %679
        %681 = vrot.lane.b32.xlu0 %v626, 113
        %v682 = vpop.permute.xlu0 %681
        %v683 = vsel %vm496, %v680, %v682
        %v684 = vsel %vm496, %v682, %v680
        %v685 = vmul.f32 %v683, %v431
        %v686 = vmul.f32 %v684, %v432
        %687 = vst [vmem:[#allocation2 + $0x60] sm:$0xff] %v685
        %688 = vst [vmem:[#allocation2 + $0x68] sm:$0xff] %v686
        %689 = vrot.lane.b32.xlu0 %v625, 112
        %v690 = vpop.permute.xlu0 %689
        %691 = vrot.lane.b32.xlu0 %v626, 112
        %v692 = vpop.permute.xlu0 %691
        %v693 = vsel %vm507, %v690, %v692
        %v694 = vsel %vm507, %v692, %v690
        %v695 = vmul.f32 %v693, %v413
        %v696 = vmul.f32 %v694, %v414
        %697 = vst [vmem:[#allocation2 + $0x70] sm:$0xff] %v695
        %698 = vst [vmem:[#allocation2 + $0x78] sm:$0xff] %v696
        %699 = vrot.lane.b32.xlu0 %v625, 111
        %v700 = vpop.permute.xlu0 %699
        %701 = vrot.lane.b32.xlu0 %v626, 111
        %v702 = vpop.permute.xlu0 %701
        %v703 = vsel %vm518, %v700, %v702
        %v704 = vsel %vm518, %v702, %v700
        %v705 = vmul.f32 %v703, %v433
        %v706 = vmul.f32 %v704, %v434
        %707 = vst [vmem:[#allocation2 + $0x80] sm:$0xff] %v705
        %708 = vst [vmem:[#allocation2 + $0x88] sm:$0xff] %v706
        %v709 = vld [vmem:[%s5] sm:$0xff]
        %v710 = vld [vmem:[#allocation2] sm:$0xff]
        %v711 = vld [vmem:[#allocation2 + $0x8] sm:$0xff]
        %v712 = vld [vmem:[#allocation2 + $0x10] sm:$0xff]
        %v713 = vld [vmem:[#allocation2 + $0x18] sm:$0xff]
        %v714 = vld [vmem:[#allocation2 + $0x20] sm:$0xff]
        %v715 = vld [vmem:[#allocation2 + $0x28] sm:$0xff]
        %v716 = vld [vmem:[#allocation2 + $0x30] sm:$0xff]
        %v717 = vld [vmem:[#allocation2 + $0x38] sm:$0xff]
        %v718 = vld [vmem:[#allocation2 + $0x40] sm:$0xff]
        %v719 = vld [vmem:[#allocation2 + $0x48] sm:$0xff]
        %v720 = vld [vmem:[#allocation2 + $0x50] sm:$0xff]
        %v721 = vld [vmem:[#allocation2 + $0x58] sm:$0xff]
        %v722 = vld [vmem:[#allocation2 + $0x60] sm:$0xff]
        %v723 = vld [vmem:[#allocation2 + $0x68] sm:$0xff]
        %v724 = vld [vmem:[#allocation2 + $0x70] sm:$0xff]
        %v725 = vld [vmem:[#allocation2 + $0x78] sm:$0xff]
        %v726 = vld [vmem:[#allocation2 + $0x80] sm:$0xff]
        %v727 = vld [vmem:[#allocation2 + $0x88] sm:$0xff]
        %v728 = vld [vmem:[%s6] sm:$0xff]
        %730 = vset.pattern.permute.xlu0 0
        %731 = vperm.xlu0 %730, %v728
        %v732 = vpop.permute.xlu0 %731
        %v735 = vsel %vm550, %v709, 0
        %737 = vmatprep.subr.mxu0 0.0
        %738 = vmatpush1.msra.mxu0 0.0
        %739 = vmatprep.subr.mxu0 0.0
        %740 = vmatpush1.msra.mxu0 0.0
        %741 = vmatprep.subr.mxu0 0.0
        %742 = vmatpush1.msra.mxu0 0.0
        %743 = vmatprep.subr.mxu0 0.0
        %744 = vmatpush1.msra.mxu0 0.0
        %745 = vmatprep.subr.mxu0 0.0
        %746 = vmatpush1.msra.mxu0 0.0
        %747 = vmatprep.subr.mxu0 0.0
        %748 = vmatpush1.msra.mxu0 0.0
        %749 = vmatprep.subr.mxu0 0.0
        %750 = vmatpush1.msra.mxu0 0.0
        %751 = vmatprep.subr.mxu0 %v727
        %752 = vmatpush1.msra.mxu0 %v726
        %753 = vmatprep.subr.mxu0 %v725
        %754 = vmatpush1.msra.mxu0 %v724
        %755 = vmatprep.subr.mxu0 %v723
        %756 = vmatpush1.msra.mxu0 %v722
        %757 = vmatprep.subr.mxu0 %v721
        %758 = vmatpush1.msra.mxu0 %v720
        %759 = vmatprep.subr.mxu0 %v719
        %760 = vmatpush1.msra.mxu0 %v718
        %761 = vmatprep.subr.mxu0 %v717
        %762 = vmatpush1.msra.mxu0 %v716
        %763 = vmatprep.subr.mxu0 %v715
        %764 = vmatpush1.msra.mxu0 %v714
        %765 = vmatprep.subr.mxu0 %v713
        %766 = vmatpush1.msra.mxu0 %v712
        %767 = vmatprep.subr.mxu0 %v711
        %768 = vmatpush1.msra.mxu0 %v710
        %769 = vmatprep.subr.mxu0 0.0
        %770 = vmatpush2.msra.mxu0 0.0
        %771 = vmatprep.subr.mxu0 0.0
        %772 = vmatpush2.msra.mxu0 0.0
        %773 = vmatprep.subr.mxu0 0.0
        %774 = vmatpush2.msra.mxu0 0.0
        %775 = vmatprep.subr.mxu0 0.0
        %776 = vmatpush2.msra.mxu0 0.0
        %777 = vmatprep.subr.mxu0 0.0
        %778 = vmatpush2.msra.mxu0 0.0
        %779 = vmatprep.subr.mxu0 0.0
        %780 = vmatpush2.msra.mxu0 0.0
        %781 = vmatprep.subr.mxu0 0.0
        %782 = vmatpush2.msra.mxu0 0.0
        %783 = vmatprep.subr.mxu0 0.0
        %784 = vmatpush2.msra.mxu0 0.0
        %785 = vmatprep.subr.mxu0 0.0
        %786 = vmatpush2.msra.mxu0 0.0
        %787 = vmatprep.subr.mxu0 0.0
        %788 = vmatpush2.msra.mxu0 0.0
        %789 = vmatprep.subr.mxu0 0.0
        %790 = vmatpush2.msra.mxu0 0.0
        %791 = vmatprep.subr.mxu0 0.0
        %792 = vmatpush2.msra.mxu0 0.0
        %793 = vmatprep.subr.mxu0 0.0
        %794 = vmatpush2.msra.mxu0 0.0
        %795 = vmatprep.subr.mxu0 0.0
        %796 = vmatpush2.msra.mxu0 0.0
        %797 = vmatprep.subr.mxu0 0.0
        %798 = vmatpush2.msra.mxu0 0.0
        %799 = vmatprep.subr.mxu0 0.0
        %800 = vmatpush2.msra.mxu0 0.0
        %801 = vmatprep.mubr.f32.mxu0 0.0
        %802 = vmatmul.mubr.f32.gmra.mxu0 %v735
        %v803 = vpop.f32.mrf.mxu0
        %v804 = vadd.f32 %v732, %v803
        %v805 = vpop.f32.mrf.mxu0
        %v806 = vadd.f32 %v732, %v805
        %807 = vdwg.mxu0
        %s808 = sld [smem:[#allocation3]]
        %s809 = sld [smem:[#allocation3 + $0x1]]
        %v810 = vstv %s808
        %v811 = vmul.f32 %v810, %v804
        %v812 = vmul.f32 %v810, %v806
        %v813 = vld [vmem:[%s310] sm:$0xff]
        %v814 = vld [vmem:[%s310 + $0x8] sm:$0xff]
        %v815 = vsub.f32 %v813, %v350
        %v816 = vsub.f32 %v814, %v351
        %v817 = vstv %s809
        %v818 = vmul.f32 %v817, %v815
        %v819 = vmul.f32 %v817, %v816
        %v820 = vadd.f32 %v811, %v818
        %v821 = vadd.f32 %v812, %v819
        %v822 = vadd.f32 %v820, %v350
        %v823 = vadd.f32 %v821, %v351
        %824 = vst [vmem:[%s346] sm:$0xff] %v822
        %825 = vst [vmem:[%s346 + $0x8] sm:$0xff] %v823
        %s826 = sand.u32 %s193, 1
        %s827 = scalar_lea.sflag [#allocation5], %s826
        %s828 = sand.u32 %s193, 1
        %s829 = smul.addr %s828, 16
        %s830 = scalar_lea.vmem [#allocation10], %s829
        // Predicated region
        $region61: #{tpu_custom_call.1} parent=47 // pred_check
          %p831 = pneg %p203
        $region62: #{tpu_custom_call.1} parent=47 // pred_check_branch
          %833 = sbr.rel (%p831) target = $region64
        $region63: #{tpu_custom_call.1} parent=47 // pred_region
          %s834 = smul.u32 2, %s28
          %s836 = ssub.s32 256, 256
          %837 = vsyncadd %s827, %s836
          %s838 = smul.addr %s834, 128
          %s839 = scalar_lea.hbm %s7, %s838
          %s841 = sshll.u32 %s830, 4
          %s842 = int_to_ptr.vmem [resolvable:$true] %s841
          %844 = dma.vmem_to_hbm [thread:$0]  %s842, 256, %s839, %s827
        $region64: #{tpu_custom_call.1} parent=47 // pred_fallthru
          _
      $region48: #{tpu_custom_call.1} parent=5 // pred_fallthru
        _
      %p845 = scmp.le.s32.totalorder 2, %s23
      // Predicated region
      $region65: #{tpu_custom_call.1} parent=5 // pred_check
        %p846 = pneg %p845
      $region66: #{tpu_custom_call.1} parent=5 // pred_check_branch
        %848 = sbr.rel (%p846) target = $region68
      $region67: #{tpu_custom_call.1} parent=5 // pred_region
        %s849 = ssub.s32 %s23, 2
        // Predicated region
        $region69: #{tpu_custom_call.1} parent=67 // pred_check
          %p850 = pneg %p209
        $region70: #{tpu_custom_call.1} parent=67 // pred_check_branch
          %852 = sbr.rel (%p850) target = $region72
        $region71: #{tpu_custom_call.1} parent=67 // pred_region
          %s853 = sand.u32 %s194, 1
          %s854 = scalar_lea.sflag [#allocation5], %s853
          %s855 = sand.u32 %s194, 1
          %s856 = smul.addr %s855, 16
          %s857 = scalar_lea.vmem [#allocation10], %s856
          %858 = dma.done %s854, 256
        $region72: #{tpu_custom_call.1} parent=67 // pred_fallthru
          _
      $region68: #{tpu_custom_call.1} parent=5 // pred_fallthru
        _
    $region6: #{tpu_custom_call.1} parent=1 // loop_footer
      %s27 = sadd.s32 1, %s23
    $region7: #{tpu_custom_call.1} parent=1 // loop_footer_branch
      %22 = sbr.rel target = $region3
    $region8: #{tpu_custom_call.1} parent=1 // loop_exit
      _
    %859 = vsyncpa [#allocation4], 1
    %s860 = scalar_lea.sflag [#allocation4], 1
    %861 = vsyncpa %s860, 1
    %862 = vsyncpa [#allocation9], 1
    %s863 = scalar_lea.sflag [#allocation9], 1
    %864 = vsyncpa %s863, 1
    %865 = vsyncpa [#allocation5], 1
    %s866 = scalar_lea.sflag [#allocation5], 1
    %867 = vsyncpa %s866, 1
    %868 = vsyncpa [#allocation6], 1
    %s869 = scalar_lea.sflag [#allocation6], 1
    %870 = vsyncpa %s869, 1

</llo_original>
